<compile_context>
chip_gen: v7x
topology: tpu7x:2x2x1
jax: 0.10.0
libtpu: 0.0.40
codegen_flags: <defaults>
</compile_context>

<pallas_src>
import jax
import jax.numpy as jnp
from jax.experimental import pallas as pl
from jax.experimental.pallas import tpu as pltpu


def _round_up(n: int, m: int) -> int:
    return ((n + m - 1) // m) * m


def _pick_batch_tile(batch: int, block_b: int) -> tuple[int, int]:
    """Largest 8-aligned batch tile <= block_b with minimal padding waste,
    keeping >= 2 grid steps when the batch allows it (v7x has 2 TensorCores;
    no-op on v5e/v6e)."""
    b8 = _round_up(batch, 8)
    max_tb = min(_round_up(block_b, 8), b8)
    if b8 >= 16:
        max_tb = min(max_tb, max(8, (b8 // 2) // 8 * 8))
    best_tb, best_bp = 8, b8
    for tb in range(8, max_tb + 1, 8):
        bp = _round_up(batch, tb)
        if bp < best_bp or (bp == best_bp and tb > best_tb):
            best_tb, best_bp = tb, bp
    return best_tb, best_bp


def _make_mlp_kernel(hid: int, out: int, n_sub: int, sub_rows: int):
    """hid/out are the padded hidden/output widths; n_sub * sub_rows == batch tile."""

    def mlp_kernel(x_ref, w1_ref, w2_ref, w3_ref, b_ref, o_ref):
        b1 = b_ref[0:1, :hid]
        b2 = b_ref[1:2, :hid]
        b3 = b_ref[2:3, :out]

        def chain(xs):
            # bf16 MXU inputs, f32 accumulation, f32 bias/ReLU epilogue
            # (safe on v5e, which has no bf16 VPU path).
            h1 = jnp.dot(xs.astype(jnp.bfloat16), w1_ref[...],
                         preferred_element_type=jnp.float32) + b1
            h1 = jnp.maximum(h1, 0.0)
            h2 = jnp.dot(h1.astype(jnp.bfloat16), w2_ref[...],
                         preferred_element_type=jnp.float32) + b2
            h2 = jnp.maximum(h2, 0.0)
            return jnp.dot(h2.astype(jnp.bfloat16), w3_ref[...],
                           preferred_element_type=jnp.float32) + b3

        if n_sub == 1:
            o_ref[...] = chain(x_ref[...]).astype(o_ref.dtype)
        else:
            # Row sub-tiles: MXU work of sub-tile k+1 overlaps the VPU
            # bias/ReLU/cast epilogue of sub-tile k.
            def body(s, carry):
                row = pl.multiple_of(s * sub_rows, sub_rows)
                xs = x_ref[pl.ds(row, sub_rows), :]
                o_ref[pl.ds(row, sub_rows), :] = chain(xs).astype(o_ref.dtype)
                return carry

            jax.lax.fori_loop(0, n_sub, body, 0, unroll=True)

    return mlp_kernel


def prepare_params(params):
    """One-time packing of PyTorch-style Linear params for the kernel.

    Zero-pads every feature dim to a 128-lane multiple, casts weights to bf16
    (native MXU input dtype) and stacks the three biases into one (3, BW) f32
    array (single DMA). Call once and reuse across forward calls -- doing it
    per call would add a full extra HBM pass over all parameters.

    Zero padding is semantics-preserving: padded input columns hit zero weight
    rows, padded hidden columns get bias 0 and relu(0)=0, padded output
    columns / batch rows are sliced off in the wrapper.
    """
    input_size, hidden_size = params["w1"].shape
    output_size = params["w3"].shape[1]
    IN, HID, OUT = (_round_up(d, 128) for d in (input_size, hidden_size, output_size))
    BW = max(HID, OUT)
    f32, bf16 = jnp.float32, jnp.bfloat16

    w1 = jnp.zeros((IN, HID), f32).at[:input_size, :hidden_size].set(params["w1"]).astype(bf16)
    w2 = jnp.zeros((HID, HID), f32).at[:hidden_size, :hidden_size].set(params["w2"]).astype(bf16)
    w3 = jnp.zeros((HID, OUT), f32).at[:hidden_size, :output_size].set(params["w3"]).astype(bf16)

    biases = jnp.zeros((3, BW), f32)
    biases = biases.at[0, :hidden_size].set(params["b1"].reshape(-1))
    biases = biases.at[1, :hidden_size].set(params["b2"].reshape(-1))
    biases = biases.at[2, :output_size].set(params["b3"].reshape(-1))

    return {"w1": w1, "w2": w2, "w3": w3, "biases": biases,
            "dims": (input_size, hidden_size, output_size)}


_SINGLE_BUFFER_WEIGHTS_OK = None  # resolved on first forward call


def _run_kernel(xp, prep, TB, single_buffer_weights):
    Bp, IN = xp.shape
    HID = prep["w2"].shape[0]
    OUT = prep["w3"].shape[1]
    BW = prep["biases"].shape[1]
    itemsize = xp.dtype.itemsize

    # Intra-tile sub-tiling (only when the tile is large enough to matter).
    if TB >= 256 and TB % 32 == 0:
        n_sub = 4
    elif TB >= 128 and TB % 16 == 0:
        n_sub = 2
    else:
        n_sub = 1
    sub_rows = TB // n_sub

    def wspec(shape):
        # Weights/biases have constant index_maps: one DMA, resident in VMEM.
        if single_buffer_weights:
            return pl.BlockSpec(shape, lambda i: (0, 0), pipeline_mode=pl.Buffered(1))
        return pl.BlockSpec(shape, lambda i: (0, 0))

    # Explicit scoped-VMEM budget: resident weights + double-buffered x/out
    # tiles + f32 intermediates, with 2x headroom, capped at 64 MiB (portable
    # across v5e/v6e/v7x physical VMEM).
    wbuf = 1 if single_buffer_weights else 2
    weight_bytes = 2 * (IN * HID + HID * HID + HID * OUT)
    bias_bytes = 4 * 3 * BW
    io_bytes = 2 * TB * (IN + OUT) * itemsize          # double-buffered x/out tiles
    scratch_bytes = 2 * 4 * sub_rows * HID             # h1/h2 f32 temporaries
    need = wbuf * (weight_bytes + bias_bytes) + io_bytes + scratch_bytes
    vmem_limit = int(min(max(2 * need, 32 * 1024 * 1024), 64 * 1024 * 1024))

    cost = pl.CostEstimate(
        flops=2 * Bp * (IN * HID + HID * HID + HID * OUT),
        transcendentals=0,
        bytes_accessed=Bp * (IN + OUT) * itemsize + weight_bytes + bias_bytes,
    )

    kernel = _make_mlp_kernel(HID, OUT, n_sub, sub_rows)
    return pl.pallas_call(
        kernel,
        out_shape=jax.ShapeDtypeStruct((Bp, OUT), xp.dtype),
        grid_spec=pl.GridSpec(
            grid=(Bp // TB,),
            in_specs=[
                pl.BlockSpec((TB, IN), lambda i: (i, 0)),   # x: streamed per batch tile
                wspec((IN, HID)),                           # weights: resident in VMEM
                wspec((HID, HID)),
                wspec((HID, OUT)),
                wspec((3, BW)),                             # stacked biases: one DMA
            ],
            out_specs=pl.BlockSpec((TB, OUT), lambda i: (i, 0)),
        ),
        compiler_params=pltpu.CompilerParams(
            dimension_semantics=("parallel",),              # megacore-shard batch (v7x)
            vmem_limit_bytes=vmem_limit,
        ),
        cost_estimate=cost,
        # TODO(synk): for very large hidden_size (resident bf16 weights near the
        # v7x 64 MiB VMEM budget), switch w2/w3 to K-tiled grid blocks with an
        # f32 accumulator scratch instead of keeping them fully resident.
    )(xp, prep["w1"], prep["w2"], prep["w3"], prep["biases"])


def neural_net_forward(x, params, *, block_b: int = 512):
    """x: (B, input_size), f32 or bf16. params: either the raw dict
    {'w1','b1','w2','b2','w3','b3'} ((in, out) weights, f32) or -- preferred --
    the cached result of prepare_params()."""
    global _SINGLE_BUFFER_WEIGHTS_OK

    prep = params if "dims" in params else prepare_params(params)
    input_size, _, output_size = prep["dims"]
    B = x.shape[0]
    IN = prep["w1"].shape[0]
    OUT = prep["w3"].shape[1]

    TB, Bp = _pick_batch_tile(B, block_b)

    # Pad x only when actually ragged (pad + final slice are each a full HBM
    # round trip on the largest streamed tensors).
    if Bp == B and IN == input_size:
        xp = x
    else:
        xp = jnp.zeros((Bp, IN), x.dtype).at[:B, :input_size].set(x)

    if _SINGLE_BUFFER_WEIGHTS_OK is None:
        # Probe once: single-buffered resident weights (halves weight VMEM);
        # fall back to default double-buffering if this JAX build rejects
        # per-operand buffer counts. Cached for all later calls.
        try:
            out_padded = _run_kernel(xp, prep, TB, single_buffer_weights=True)
            _SINGLE_BUFFER_WEIGHTS_OK = True
        except Exception:
            _SINGLE_BUFFER_WEIGHTS_OK = False
            out_padded = _run_kernel(xp, prep, TB, single_buffer_weights=False)
    else:
        out_padded = _run_kernel(xp, prep, TB,
                                 single_buffer_weights=_SINGLE_BUFFER_WEIGHTS_OK)

    if Bp == B and OUT == output_size:
        return out_padded
    return out_padded[:B, :output_size]


def init_params(key, input_size, hidden_size, output_size):
    """Deterministic init mimicking nn.Linear (uniform in +/- 1/sqrt(fan_in)).
    Weights stored as (in, out) so the kernel computes x @ W (== PyTorch x @ W.T)."""
    ks = jax.random.split(key, 6)

    def linear(kw, kb, fan_in, fan_out):
        bound = 1.0 / jnp.sqrt(fan_in)
        w = jax.random.uniform(kw, (fan_in, fan_out), jnp.float32, -bound, bound)
        b = jax.random.uniform(kb, (fan_out,), jnp.float32, -bound, bound)
        return w, b

    w1, b1 = linear(ks[0], ks[1], input_size, hidden_size)
    w2, b2 = linear(ks[2], ks[3], hidden_size, hidden_size)
    w3, b3 = linear(ks[4], ks[5], hidden_size, output_size)
    return {"w1": w1, "b1": b1, "w2": w2, "b2": b2, "w3": w3, "b3": b3}


def ref_forward(x, params):
    """Pure-JAX reference matching the kernel math (bf16 MXU inputs, f32 accum)."""
    bf16 = jnp.bfloat16
    h = jnp.maximum(jnp.dot(x.astype(bf16), params["w1"].astype(bf16),
                            preferred_element_type=jnp.float32) + params["b1"], 0.0)
    h = jnp.maximum(jnp.dot(h.astype(bf16), params["w2"].astype(bf16),
                            preferred_element_type=jnp.float32) + params["b2"], 0.0)
    return jnp.dot(h.astype(bf16), params["w3"].astype(bf16),
                   preferred_element_type=jnp.float32) + params["b3"]


if __name__ == "__main__":
    def run_case(batch, input_size, hidden_size, output_size, key, tol, check_f32=False):
        k_params, k_x = jax.random.split(key)
        params = init_params(k_params, input_size, hidden_size, output_size)
        x = jax.random.normal(k_x, (batch, input_size), dtype=jnp.float32)

        prepared = prepare_params(params)          # one-time pad + bf16 cast
        out = jax.block_until_ready(neural_net_forward(x, prepared))

        assert out.shape == (batch, output_size)
        ref = ref_forward(x, params)
        err = float(jnp.max(jnp.abs(out - ref)))
        assert jnp.allclose(out, ref, atol=tol, rtol=tol), err

        if check_f32:
            # Loose sanity check against full-f32 PyTorch-equivalent math.
            h = jnp.maximum(x @ params["w1"] + params["b1"], 0.0)
            h = jnp.maximum(h @ params["w2"] + params["b2"], 0.0)
            ref_f32 = h @ params["w3"] + params["b3"]
            assert jnp.allclose(out, ref_f32, atol=5e-2, rtol=5e-2)

    key = jax.random.PRNGKey(0)
    k1, k2 = jax.random.split(key)
    # Small, single grid step (matches the tiny spec shapes).
    run_case(8, 32, 32, 16, k1, tol=1e-3, check_f32=True)
    # Ragged batch / in / out, grid of 2 steps, in-kernel row sub-tiling.
    run_case(510, 96, 256, 130, k2, tol=5e-3)

    print("KERNEL_OK")
</pallas_src>

<mosaic_0001>
module attributes {stable_mosaic.version = 11 : i64} {
  func.func @mlp_kernel(%arg0: i32, %arg1: memref<8x128xf32, #tpu.memory_space<vmem>>, %arg2: memref<128x128xbf16, #tpu.memory_space<vmem>>, %arg3: memref<128x128xbf16, #tpu.memory_space<vmem>>, %arg4: memref<128x128xbf16, #tpu.memory_space<vmem>>, %arg5: memref<3x128xf32, #tpu.memory_space<vmem>>, %arg6: memref<8x128xf32, #tpu.memory_space<vmem>>) attributes {dimension_semantics = [#tpu.dimension_semantics<parallel>], iteration_bounds = array<i64: 1>, scalar_prefetch = 0 : i64, scratch_operands = 0 : i64, tpu.core_type = #tpu.core_type<tc>, window_params = [{transform_indices = @transform_0, window_bounds = array<i64: 8, 128>}, {pipeline_mode = #tpu.pipeline_mode<synchronous>, transform_indices = @transform_1, window_bounds = array<i64: 128, 128>}, {pipeline_mode = #tpu.pipeline_mode<synchronous>, transform_indices = @transform_2, window_bounds = array<i64: 128, 128>}, {pipeline_mode = #tpu.pipeline_mode<synchronous>, transform_indices = @transform_3, window_bounds = array<i64: 128, 128>}, {pipeline_mode = #tpu.pipeline_mode<synchronous>, transform_indices = @transform_4, window_bounds = array<i64: 3, 128>}, {transform_indices = @transform_5, window_bounds = array<i64: 8, 128>}]} {
    %c0 = arith.constant 0 : index
    %c0_0 = arith.constant 0 : index
    %0 = vector.load %arg5[%c0, %c0_0] : memref<3x128xf32, #tpu.memory_space<vmem>>, vector<1x128xf32>
    %c1 = arith.constant 1 : index
    %c0_1 = arith.constant 0 : index
    %1 = vector.load %arg5[%c1, %c0_1] : memref<3x128xf32, #tpu.memory_space<vmem>>, vector<1x128xf32>
    %c2 = arith.constant 2 : index
    %c0_2 = arith.constant 0 : index
    %2 = vector.load %arg5[%c2, %c0_2] : memref<3x128xf32, #tpu.memory_space<vmem>>, vector<1x128xf32>
    %c0_3 = arith.constant 0 : index
    %c0_4 = arith.constant 0 : index
    %3 = vector.load %arg1[%c0_3, %c0_4] : memref<8x128xf32, #tpu.memory_space<vmem>>, vector<8x128xf32>
    %4 = arith.truncf %3 : vector<8x128xf32> to vector<8x128xbf16>
    %c0_5 = arith.constant 0 : index
    %c0_6 = arith.constant 0 : index
    %5 = vector.load %arg2[%c0_5, %c0_6] : memref<128x128xbf16, #tpu.memory_space<vmem>>, vector<128x128xbf16>
    %cst = arith.constant dense<0.000000e+00> : vector<8x128xf32>
    %6 = tpu.matmul %4, %5, %cst {dimension_numbers = #tpu.dot_dimension_numbers<[1], [0], [0], [1], [0, 0, 1, 1], [], []>} : vector<8x128xbf16>, vector<128x128xbf16>, vector<8x128xf32> -> vector<8x128xf32>
    %7 = vector.broadcast %0 : vector<1x128xf32> to vector<8x128xf32>
    %8 = arith.addf %6, %7 : vector<8x128xf32>
    %cst_7 = arith.constant 0.000000e+00 : f32
    %9 = vector.broadcast %cst_7 : f32 to vector<8x128xf32>
    %10 = arith.maximumf %8, %9 : vector<8x128xf32>
    %11 = arith.truncf %10 : vector<8x128xf32> to vector<8x128xbf16>
    %c0_8 = arith.constant 0 : index
    %c0_9 = arith.constant 0 : index
    %12 = vector.load %arg3[%c0_8, %c0_9] : memref<128x128xbf16, #tpu.memory_space<vmem>>, vector<128x128xbf16>
    %cst_10 = arith.constant dense<0.000000e+00> : vector<8x128xf32>
    %13 = tpu.matmul %11, %12, %cst_10 {dimension_numbers = #tpu.dot_dimension_numbers<[1], [0], [0], [1], [0, 0, 1, 1], [], []>} : vector<8x128xbf16>, vector<128x128xbf16>, vector<8x128xf32> -> vector<8x128xf32>
    %14 = vector.broadcast %1 : vector<1x128xf32> to vector<8x128xf32>
    %15 = arith.addf %13, %14 : vector<8x128xf32>
    %cst_11 = arith.constant 0.000000e+00 : f32
    %16 = vector.broadcast %cst_11 : f32 to vector<8x128xf32>
    %17 = arith.maximumf %15, %16 : vector<8x128xf32>
    %18 = arith.truncf %17 : vector<8x128xf32> to vector<8x128xbf16>
    %c0_12 = arith.constant 0 : index
    %c0_13 = arith.constant 0 : index
    %19 = vector.load %arg4[%c0_12, %c0_13] : memref<128x128xbf16, #tpu.memory_space<vmem>>, vector<128x128xbf16>
    %cst_14 = arith.constant dense<0.000000e+00> : vector<8x128xf32>
    %20 = tpu.matmul %18, %19, %cst_14 {dimension_numbers = #tpu.dot_dimension_numbers<[1], [0], [0], [1], [0, 0, 1, 1], [], []>} : vector<8x128xbf16>, vector<128x128xbf16>, vector<8x128xf32> -> vector<8x128xf32>
    %21 = vector.broadcast %2 : vector<1x128xf32> to vector<8x128xf32>
    %22 = arith.addf %20, %21 : vector<8x128xf32>
    %c0_15 = arith.constant 0 : index
    %c0_16 = arith.constant 0 : index
    %23 = vector.load %arg6[%c0_15, %c0_16] : memref<8x128xf32, #tpu.memory_space<vmem>>, vector<8x128xf32>
    tpu.vector_store %arg6[%c0_15, %c0_16], %22 {strides = array<i32>} : memref<8x128xf32, #tpu.memory_space<vmem>>, vector<8x128xf32>,
    return
  }
  func.func @transform_0(%arg0: i32) -> (i32, i32) {
    %c0_i32 = arith.constant 0 : i32
    %c0_i32_0 = arith.constant 0 : i32
    return %arg0, %c0_i32 : i32, i32
  }
  func.func @transform_1(%arg0: i32) -> (i32, i32) {
    %c0_i32 = arith.constant 0 : i32
    %c0_i32_0 = arith.constant 0 : i32
    %c0_i32_1 = arith.constant 0 : i32
    return %c0_i32, %c0_i32_0 : i32, i32
  }
  func.func @transform_2(%arg0: i32) -> (i32, i32) {
    %c0_i32 = arith.constant 0 : i32
    %c0_i32_0 = arith.constant 0 : i32
    %c0_i32_1 = arith.constant 0 : i32
    return %c0_i32, %c0_i32_0 : i32, i32
  }
  func.func @transform_3(%arg0: i32) -> (i32, i32) {
    %c0_i32 = arith.constant 0 : i32
    %c0_i32_0 = arith.constant 0 : i32
    %c0_i32_1 = arith.constant 0 : i32
    return %c0_i32, %c0_i32_0 : i32, i32
  }
  func.func @transform_4(%arg0: i32) -> (i32, i32) {
    %c0_i32 = arith.constant 0 : i32
    %c0_i32_0 = arith.constant 0 : i32
    %c0_i32_1 = arith.constant 0 : i32
    return %c0_i32, %c0_i32_0 : i32, i32
  }
  func.func @transform_5(%arg0: i32) -> (i32, i32) {
    %c0_i32 = arith.constant 0 : i32
    %c0_i32_0 = arith.constant 0 : i32
    return %arg0, %c0_i32 : i32, i32
  }
}

module attributes {stable_mosaic.version = 11 : i64} {
  func.func @mlp_kernel(%arg0: i32, %arg1: memref<8x128xf32, #tpu.memory_space<vmem>>, %arg2: memref<128x128xbf16, #tpu.memory_space<vmem>>, %arg3: memref<128x128xbf16, #tpu.memory_space<vmem>>, %arg4: memref<128x128xbf16, #tpu.memory_space<vmem>>, %arg5: memref<3x128xf32, #tpu.memory_space<vmem>>, %arg6: memref<8x128xf32, #tpu.memory_space<vmem>>) attributes {dimension_semantics = [#tpu.dimension_semantics<parallel>], iteration_bounds = array<i64: 1>, scalar_prefetch = 0 : i64, scratch_operands = 0 : i64, tpu.core_type = #tpu.core_type<tc>, window_params = [{transform_indices = @transform_0, window_bounds = array<i64: 8, 128>}, {pipeline_mode = #tpu.pipeline_mode<synchronous>, transform_indices = @transform_1, window_bounds = array<i64: 128, 128>}, {pipeline_mode = #tpu.pipeline_mode<synchronous>, transform_indices = @transform_2, window_bounds = array<i64: 128, 128>}, {pipeline_mode = #tpu.pipeline_mode<synchronous>, transform_indices = @transform_3, window_bounds = array<i64: 128, 128>}, {pipeline_mode = #tpu.pipeline_mode<synchronous>, transform_indices = @transform_4, window_bounds = array<i64: 3, 128>}, {transform_indices = @transform_5, window_bounds = array<i64: 8, 128>}]} {
    %c0 = arith.constant 0 : index
    %c0_0 = arith.constant 0 : index
    %0 = vector.load %arg5[%c0, %c0_0] : memref<3x128xf32, #tpu.memory_space<vmem>>, vector<1x128xf32>
    %c1 = arith.constant 1 : index
    %c0_1 = arith.constant 0 : index
    %1 = vector.load %arg5[%c1, %c0_1] : memref<3x128xf32, #tpu.memory_space<vmem>>, vector<1x128xf32>
    %c2 = arith.constant 2 : index
    %c0_2 = arith.constant 0 : index
    %2 = vector.load %arg5[%c2, %c0_2] : memref<3x128xf32, #tpu.memory_space<vmem>>, vector<1x128xf32>
    %c0_3 = arith.constant 0 : index
    %c0_4 = arith.constant 0 : index
    %3 = vector.load %arg1[%c0_3, %c0_4] : memref<8x128xf32, #tpu.memory_space<vmem>>, vector<8x128xf32>
    %4 = arith.truncf %3 : vector<8x128xf32> to vector<8x128xbf16>
    %c0_5 = arith.constant 0 : index
    %c0_6 = arith.constant 0 : index
    %5 = vector.load %arg2[%c0_5, %c0_6] : memref<128x128xbf16, #tpu.memory_space<vmem>>, vector<128x128xbf16>
    %cst = arith.constant dense<0.000000e+00> : vector<8x128xf32>
    %6 = tpu.matmul %4, %5, %cst {dimension_numbers = #tpu.dot_dimension_numbers<[1], [0], [0], [1], [0, 0, 1, 1], [], []>} : vector<8x128xbf16>, vector<128x128xbf16>, vector<8x128xf32> -> vector<8x128xf32>
    %7 = vector.broadcast %0 : vector<1x128xf32> to vector<8x128xf32>
    %8 = arith.addf %6, %7 : vector<8x128xf32>
    %cst_7 = arith.constant 0.000000e+00 : f32
    %9 = vector.broadcast %cst_7 : f32 to vector<8x128xf32>
    %10 = arith.maximumf %8, %9 : vector<8x128xf32>
    %11 = arith.truncf %10 : vector<8x128xf32> to vector<8x128xbf16>
    %c0_8 = arith.constant 0 : index
    %c0_9 = arith.constant 0 : index
    %12 = vector.load %arg3[%c0_8, %c0_9] : memref<128x128xbf16, #tpu.memory_space<vmem>>, vector<128x128xbf16>
    %cst_10 = arith.constant dense<0.000000e+00> : vector<8x128xf32>
    %13 = tpu.matmul %11, %12, %cst_10 {dimension_numbers = #tpu.dot_dimension_numbers<[1], [0], [0], [1], [0, 0, 1, 1], [], []>} : vector<8x128xbf16>, vector<128x128xbf16>, vector<8x128xf32> -> vector<8x128xf32>
    %14 = vector.broadcast %1 : vector<1x128xf32> to vector<8x128xf32>
    %15 = arith.addf %13, %14 : vector<8x128xf32>
    %cst_11 = arith.constant 0.000000e+00 : f32
    %16 = vector.broadcast %cst_11 : f32 to vector<8x128xf32>
    %17 = arith.maximumf %15, %16 : vector<8x128xf32>
    %18 = arith.truncf %17 : vector<8x128xf32> to vector<8x128xbf16>
    %c0_12 = arith.constant 0 : index
    %c0_13 = arith.constant 0 : index
    %19 = vector.load %arg4[%c0_12, %c0_13] : memref<128x128xbf16, #tpu.memory_space<vmem>>, vector<128x128xbf16>
    %cst_14 = arith.constant dense<0.000000e+00> : vector<8x128xf32>
    %20 = tpu.matmul %18, %19, %cst_14 {dimension_numbers = #tpu.dot_dimension_numbers<[1], [0], [0], [1], [0, 0, 1, 1], [], []>} : vector<8x128xbf16>, vector<128x128xbf16>, vector<8x128xf32> -> vector<8x128xf32>
    %21 = vector.broadcast %2 : vector<1x128xf32> to vector<8x128xf32>
    %22 = arith.addf %20, %21 : vector<8x128xf32>
    %c0_15 = arith.constant 0 : index
    %c0_16 = arith.constant 0 : index
    %23 = vector.load %arg6[%c0_15, %c0_16] : memref<8x128xf32, #tpu.memory_space<vmem>>, vector<8x128xf32>
    tpu.vector_store %arg6[%c0_15, %c0_16], %22 {strides = array<i32>} : memref<8x128xf32, #tpu.memory_space<vmem>>, vector<8x128xf32>,
    return
  }
  func.func @transform_0(%arg0: i32) -> (i32, i32) {
    %c0_i32 = arith.constant 0 : i32
    %c0_i32_0 = arith.constant 0 : i32
    return %arg0, %c0_i32 : i32, i32
  }
  func.func @transform_1(%arg0: i32) -> (i32, i32) {
    %c0_i32 = arith.constant 0 : i32
    %c0_i32_0 = arith.constant 0 : i32
    %c0_i32_1 = arith.constant 0 : i32
    return %c0_i32, %c0_i32_0 : i32, i32
  }
  func.func @transform_2(%arg0: i32) -> (i32, i32) {
    %c0_i32 = arith.constant 0 : i32
    %c0_i32_0 = arith.constant 0 : i32
    %c0_i32_1 = arith.constant 0 : i32
    return %c0_i32, %c0_i32_0 : i32, i32
  }
  func.func @transform_3(%arg0: i32) -> (i32, i32) {
    %c0_i32 = arith.constant 0 : i32
    %c0_i32_0 = arith.constant 0 : i32
    %c0_i32_1 = arith.constant 0 : i32
    return %c0_i32, %c0_i32_0 : i32, i32
  }
  func.func @transform_4(%arg0: i32) -> (i32, i32) {
    %c0_i32 = arith.constant 0 : i32
    %c0_i32_0 = arith.constant 0 : i32
    %c0_i32_1 = arith.constant 0 : i32
    return %c0_i32, %c0_i32_0 : i32, i32
  }
  func.func @transform_5(%arg0: i32) -> (i32, i32) {
    %c0_i32 = arith.constant 0 : i32
    %c0_i32_0 = arith.constant 0 : i32
    return %arg0, %c0_i32 : i32, i32
  }
}

</mosaic_0001>

<llo_original>
// kernel: tpu_custom_call.1
$region0: #{tpu_custom_call.1}
  #allocation0 [shape = 'u32[]', space=smem, size = 0x4, offset = 0x4, fixed_abs, tag = 'smem constant byte address 0x4 - core index']
  #allocation1 [shape = 'u32[144,128]{1,0:T(1,128)}', space=vmem, size = 0x12000, scoped, tag = 'internal scratch']
  %s0 = inlined_call_operand.hbm [shape: f32[8,128], index: 0, kind: input, shape index: {}]
  %s1 = inlined_call_operand.hbm [shape: bf16[128,128], index: 1, kind: input, shape index: {}]
  %s2 = inlined_call_operand.hbm [shape: bf16[128,128], index: 2, kind: input, shape index: {}]
  %s3 = inlined_call_operand.hbm [shape: bf16[128,128], index: 3, kind: input, shape index: {}]
  %s4 = inlined_call_operand.vmem [shape: f32[3,128], index: 4, kind: input, shape index: {}]
  %s5 = inlined_call_operand.hbm [shape: f32[8,128], index: 5, kind: output, shape index: {}]
  %s6 = sld [smem:[#allocation0]]
  $region46: #{tpu_custom_call.1} parent=0
    _
  %s8 = ssub.s32 1, %s6
  %s9 = scalar_select 0, %s8, %s6
  $region1: #{tpu_custom_call.1} parent=0
    #allocation2 [shape = 'u8[4096]{0}', space=vmem, size = 0x1000, scoped, tag = 'input window, operand 0, single buffered']
    #allocation3 [shape = 's32[1]{0}', space=sflag, size = 0x4, scoped, tag = 'scoped memory for tpu_custom_call.1']
    #allocation4 [shape = 's32[1]{0}', space=sflag, size = 0x4, scoped, tag = 'scoped memory for tpu_custom_call.1']
    #allocation5 [shape = 'u8[32768]{0}', space=vmem, size = 0x8000, scoped, tag = 'input window, operand 1, single buffered']
    #allocation6 [shape = 's32[1]{0}', space=sflag, size = 0x4, scoped, tag = 'scoped memory for tpu_custom_call.1']
    #allocation7 [shape = 'u8[32768]{0}', space=vmem, size = 0x8000, scoped, tag = 'input window, operand 2, single buffered']
    #allocation8 [shape = 'u8[32768]{0}', space=vmem, size = 0x8000, scoped, tag = 'input window, operand 3, single buffered']
    #allocation9 [shape = 's32[1]{0}', space=sflag, size = 0x4, scoped, tag = 'scoped memory for tpu_custom_call.1']
    #allocation10 [shape = 'u8[4096]{0}', space=vmem, size = 0x1000, scoped, tag = 'output window, operand 0, single buffered']
    %10 = vsyncpa [#allocation3], 0
    %11 = vsyncpa [#allocation6], 0
    %12 = vsyncpa [#allocation9], 0
    %13 = vsyncpa [#allocation4], 0
    // Predicated region
    $region2: #{tpu_custom_call.1} parent=1 // pred_check
      _
    $region3: #{tpu_custom_call.1} parent=1 // pred_check_branch
      %15 = sbr.rel (0) target = $region5
    $region4: #{tpu_custom_call.1} parent=1 // pred_region
      %s17 = ssub.s32 128, 128
      %18 = vsyncadd [#allocation3], %s17
      %s20 = sshll.u32 [#allocation2], 4
      %s21 = int_to_ptr.vmem [resolvable:$true] %s20
      %23 = dma.hbm_to_vmem [thread:$0]  %s0, 128, %s21, [#allocation3]
    $region5: #{tpu_custom_call.1} parent=1 // pred_fallthru
      _
    // Predicated region
    $region6: #{tpu_custom_call.1} parent=1 // pred_check
      _
    $region7: #{tpu_custom_call.1} parent=1 // pred_check_branch
      %25 = sbr.rel (0) target = $region9
    $region8: #{tpu_custom_call.1} parent=1 // pred_region
      %s27 = ssub.s32 1024, 1024
      %28 = vsyncadd [#allocation6], %s27
      %s29 = sshll.u32 [#allocation5], 4
      %s30 = int_to_ptr.vmem [resolvable:$true] %s29
      %35 = dma.hbm_to_vmem [thread:$0]  %s1, 1024, %s30, [#allocation6], 64, 64, 4
    $region9: #{tpu_custom_call.1} parent=1 // pred_fallthru
      _
    // Predicated region
    $region10: #{tpu_custom_call.1} parent=1 // pred_check
      _
    $region11: #{tpu_custom_call.1} parent=1 // pred_check_branch
      %37 = sbr.rel (0) target = $region13
    $region12: #{tpu_custom_call.1} parent=1 // pred_region
      %s39 = ssub.s32 1024, 1024
      %40 = vsyncadd [#allocation6], %s39
      %s41 = sshll.u32 [#allocation7], 4
      %s42 = int_to_ptr.vmem [resolvable:$true] %s41
      %47 = dma.hbm_to_vmem [thread:$0]  %s2, 1024, %s42, [#allocation6], 64, 64, 4
    $region13: #{tpu_custom_call.1} parent=1 // pred_fallthru
      _
    // Predicated region
    $region14: #{tpu_custom_call.1} parent=1 // pred_check
      _
    $region15: #{tpu_custom_call.1} parent=1 // pred_check_branch
      %49 = sbr.rel (0) target = $region17
    $region16: #{tpu_custom_call.1} parent=1 // pred_region
      %s51 = ssub.s32 1024, 1024
      %52 = vsyncadd [#allocation9], %s51
      %s53 = sshll.u32 [#allocation8], 4
      %s54 = int_to_ptr.vmem [resolvable:$true] %s53
      %59 = dma.hbm_to_vmem [thread:$0]  %s3, 1024, %s54, [#allocation9], 64, 64, 4
    $region17: #{tpu_custom_call.1} parent=1 // pred_fallthru
      _
    // Predicated region
    $region18: #{tpu_custom_call.1} parent=1 // pred_check
      _
    $region19: #{tpu_custom_call.1} parent=1 // pred_check_branch
      %61 = sbr.rel (0) target = $region21
    $region20: #{tpu_custom_call.1} parent=1 // pred_region
      _
    $region21: #{tpu_custom_call.1} parent=1 // pred_fallthru
      _
    // Predicated region
    $region22: #{tpu_custom_call.1} parent=1 // pred_check
      _
    $region23: #{tpu_custom_call.1} parent=1 // pred_check_branch
      %63 = sbr.rel (0) target = $region25
    $region24: #{tpu_custom_call.1} parent=1 // pred_region
      %64 = dma.done [#allocation3], 128
    $region25: #{tpu_custom_call.1} parent=1 // pred_fallthru
      _
    // Predicated region
    $region26: #{tpu_custom_call.1} parent=1 // pred_check
      _
    $region27: #{tpu_custom_call.1} parent=1 // pred_check_branch
      %66 = sbr.rel (0) target = $region29
    $region28: #{tpu_custom_call.1} parent=1 // pred_region
      %67 = dma.done [#allocation6], 1024
    $region29: #{tpu_custom_call.1} parent=1 // pred_fallthru
      _
    // Predicated region
    $region30: #{tpu_custom_call.1} parent=1 // pred_check
      _
    $region31: #{tpu_custom_call.1} parent=1 // pred_check_branch
      %69 = sbr.rel (0) target = $region33
    $region32: #{tpu_custom_call.1} parent=1 // pred_region
      %70 = dma.done [#allocation6], 1024
    $region33: #{tpu_custom_call.1} parent=1 // pred_fallthru
      _
    // Predicated region
    $region34: #{tpu_custom_call.1} parent=1 // pred_check
      _
    $region35: #{tpu_custom_call.1} parent=1 // pred_check_branch
      %72 = sbr.rel (0) target = $region37
    $region36: #{tpu_custom_call.1} parent=1 // pred_region
      %73 = dma.done [#allocation9], 1024
    $region37: #{tpu_custom_call.1} parent=1 // pred_fallthru
      _
    %v75 = vld [vmem:[%s4] sm:$0x1]
    %v76 = vld [vmem:[%s4 + $0x1] sm:$0x1]
    %v77 = vld [vmem:[%s4 + $0x2] sm:$0x1]
    %v78 = vld [vmem:[#allocation2] sm:$0xff]
    %v79 = vpack.c.bf16 %v78, %v78
    %v80 = vld [vmem:[#allocation5] sm:$0xf]
    %v81 = vld [vmem:[#allocation5 + $0x4] sm:$0xf]
    %v82 = vld [vmem:[#allocation5 + $0x8] sm:$0xf]
    %v83 = vld [vmem:[#allocation5 + $0xc] sm:$0xf]
    %v84 = vld [vmem:[#allocation5 + $0x10] sm:$0xf]
    %v85 = vld [vmem:[#allocation5 + $0x14] sm:$0xf]
    %v86 = vld [vmem:[#allocation5 + $0x18] sm:$0xf]
    %v87 = vld [vmem:[#allocation5 + $0x1c] sm:$0xf]
    %v88 = vld [vmem:[#allocation5 + $0x20] sm:$0xf]
    %v89 = vld [vmem:[#allocation5 + $0x24] sm:$0xf]
    %v90 = vld [vmem:[#allocation5 + $0x28] sm:$0xf]
    %v91 = vld [vmem:[#allocation5 + $0x2c] sm:$0xf]
    %v92 = vld [vmem:[#allocation5 + $0x30] sm:$0xf]
    %v93 = vld [vmem:[#allocation5 + $0x34] sm:$0xf]
    %v94 = vld [vmem:[#allocation5 + $0x38] sm:$0xf]
    %v95 = vld [vmem:[#allocation5 + $0x3c] sm:$0xf]
    %v96 = vlaneseq
    %v97 = vshrl.u32 %v96, 7
    %v98 = vsub.s32 0, %v97
    %v99 = vrot.slane %v75, %v98
    %v116 = vunpack.c.l.b16 %v80
    %v117 = vunpack.c.l.b16 %v81
    %v118 = vunpack.c.l.b16 %v82
    %v119 = vunpack.c.l.b16 %v83
    %v120 = vunpack.c.l.b16 %v84
    %v121 = vunpack.c.l.b16 %v85
    %v122 = vunpack.c.l.b16 %v86
    %v123 = vunpack.c.l.b16 %v87
    %v124 = vunpack.c.l.b16 %v88
    %v125 = vunpack.c.l.b16 %v89
    %v126 = vunpack.c.l.b16 %v90
    %v127 = vunpack.c.l.b16 %v91
    %v128 = vunpack.c.l.b16 %v92
    %v129 = vunpack.c.l.b16 %v93
    %v130 = vunpack.c.l.b16 %v94
    %v131 = vunpack.c.l.b16 %v95
    %v132 = vpack.c.b16 %v117, %v116
    %v133 = vpack.c.b16 %v119, %v118
    %v134 = vpack.c.b16 %v121, %v120
    %v135 = vpack.c.b16 %v123, %v122
    %v136 = vpack.c.b16 %v125, %v124
    %v137 = vpack.c.b16 %v127, %v126
    %v138 = vpack.c.b16 %v129, %v128
    %v139 = vpack.c.b16 %v131, %v130
    %148 = vmatprep.subr.bf16.mxu0 0
    %149 = vmatpush1.bf16.msra.mxu0 %v132
    %150 = vmatprep.subr.bf16.mxu0 0
    %151 = vmatpush1.bf16.msra.mxu0 %v133
    %152 = vmatprep.subr.bf16.mxu0 0
    %153 = vmatpush1.bf16.msra.mxu0 %v134
    %154 = vmatprep.subr.bf16.mxu0 0
    %155 = vmatpush1.bf16.msra.mxu0 %v135
    %156 = vmatprep.subr.bf16.mxu0 0
    %157 = vmatpush1.bf16.msra.mxu0 %v136
    %158 = vmatprep.subr.bf16.mxu0 0
    %159 = vmatpush1.bf16.msra.mxu0 %v137
    %160 = vmatprep.subr.bf16.mxu0 0
    %161 = vmatpush1.bf16.msra.mxu0 %v138
    %162 = vmatprep.subr.bf16.mxu0 0
    %163 = vmatpush1.bf16.msra.mxu0 %v139
    %164 = vmatprep.subr.bf16.mxu0 0
    %165 = vmatpush1.bf16.msra.mxu0 0
    %166 = vmatprep.subr.bf16.mxu0 0
    %167 = vmatpush1.bf16.msra.mxu0 0
    %168 = vmatprep.subr.bf16.mxu0 0
    %169 = vmatpush1.bf16.msra.mxu0 0
    %170 = vmatprep.subr.bf16.mxu0 0
    %171 = vmatpush1.bf16.msra.mxu0 0
    %172 = vmatprep.subr.bf16.mxu0 0
    %173 = vmatpush1.bf16.msra.mxu0 0
    %174 = vmatprep.subr.bf16.mxu0 0
    %175 = vmatpush1.bf16.msra.mxu0 0
    %176 = vmatprep.subr.bf16.mxu0 0
    %177 = vmatpush1.bf16.msra.mxu0 0
    %178 = vmatprep.subr.bf16.mxu0 0
    %179 = vmatpush1.bf16.msra.mxu0 0
    %180 = vmatprep.mubr.bf16.mxu0 0
    %181 = vmatmul.mubr.bf16.gmra.mrb[0].mxu0 %v79
    %v182 = vpop.f32.mrb[0].mxu0
    %v183 = vadd.f32 %v99, %v182
    %v184 = vpop.f32.mrb[0].mxu0
    %v185 = vpop.f32.mrb[0].mxu0
    %v186 = vpop.f32.mrb[0].mxu0
    %187 = vdwg.mxu0
    %v188 = vmax.f32 %v183, 0.0
    %v189 = vpack.c.bf16 %v188, %v188
    %v190 = vld [vmem:[#allocation7] sm:$0xf]
    %v191 = vld [vmem:[#allocation7 + $0x4] sm:$0xf]
    %v192 = vld [vmem:[#allocation7 + $0x8] sm:$0xf]
    %v193 = vld [vmem:[#allocation7 + $0xc] sm:$0xf]
    %v194 = vld [vmem:[#allocation7 + $0x10] sm:$0xf]
    %v195 = vld [vmem:[#allocation7 + $0x14] sm:$0xf]
    %v196 = vld [vmem:[#allocation7 + $0x18] sm:$0xf]
    %v197 = vld [vmem:[#allocation7 + $0x1c] sm:$0xf]
    %v198 = vld [vmem:[#allocation7 + $0x20] sm:$0xf]
    %v199 = vld [vmem:[#allocation7 + $0x24] sm:$0xf]
    %v200 = vld [vmem:[#allocation7 + $0x28] sm:$0xf]
    %v201 = vld [vmem:[#allocation7 + $0x2c] sm:$0xf]
    %v202 = vld [vmem:[#allocation7 + $0x30] sm:$0xf]
    %v203 = vld [vmem:[#allocation7 + $0x34] sm:$0xf]
    %v204 = vld [vmem:[#allocation7 + $0x38] sm:$0xf]
    %v205 = vld [vmem:[#allocation7 + $0x3c] sm:$0xf]
    %v206 = vlaneseq
    %v207 = vshrl.u32 %v206, 7
    %v208 = vsub.s32 0, %v207
    %v209 = vrot.slane %v76, %v208
    %v226 = vunpack.c.l.b16 %v190
    %v227 = vunpack.c.l.b16 %v191
    %v228 = vunpack.c.l.b16 %v192
    %v229 = vunpack.c.l.b16 %v193
    %v230 = vunpack.c.l.b16 %v194
    %v231 = vunpack.c.l.b16 %v195
    %v232 = vunpack.c.l.b16 %v196
    %v233 = vunpack.c.l.b16 %v197
    %v234 = vunpack.c.l.b16 %v198
    %v235 = vunpack.c.l.b16 %v199
    %v236 = vunpack.c.l.b16 %v200
    %v237 = vunpack.c.l.b16 %v201
    %v238 = vunpack.c.l.b16 %v202
    %v239 = vunpack.c.l.b16 %v203
    %v240 = vunpack.c.l.b16 %v204
    %v241 = vunpack.c.l.b16 %v205
    %v242 = vpack.c.b16 %v227, %v226
    %v243 = vpack.c.b16 %v229, %v228
    %v244 = vpack.c.b16 %v231, %v230
    %v245 = vpack.c.b16 %v233, %v232
    %v246 = vpack.c.b16 %v235, %v234
    %v247 = vpack.c.b16 %v237, %v236
    %v248 = vpack.c.b16 %v239, %v238
    %v249 = vpack.c.b16 %v241, %v240
    %258 = vmatprep.subr.bf16.mxu0 0
    %259 = vmatpush1.bf16.msra.mxu0 %v242
    %260 = vmatprep.subr.bf16.mxu0 0
    %261 = vmatpush1.bf16.msra.mxu0 %v243
    %262 = vmatprep.subr.bf16.mxu0 0
    %263 = vmatpush1.bf16.msra.mxu0 %v244
    %264 = vmatprep.subr.bf16.mxu0 0
    %265 = vmatpush1.bf16.msra.mxu0 %v245
    %266 = vmatprep.subr.bf16.mxu0 0
    %267 = vmatpush1.bf16.msra.mxu0 %v246
    %268 = vmatprep.subr.bf16.mxu0 0
    %269 = vmatpush1.bf16.msra.mxu0 %v247
    %270 = vmatprep.subr.bf16.mxu0 0
    %271 = vmatpush1.bf16.msra.mxu0 %v248
    %272 = vmatprep.subr.bf16.mxu0 0
    %273 = vmatpush1.bf16.msra.mxu0 %v249
    %274 = vmatprep.subr.bf16.mxu0 0
    %275 = vmatpush1.bf16.msra.mxu0 0
    %276 = vmatprep.subr.bf16.mxu0 0
    %277 = vmatpush1.bf16.msra.mxu0 0
    %278 = vmatprep.subr.bf16.mxu0 0
    %279 = vmatpush1.bf16.msra.mxu0 0
    %280 = vmatprep.subr.bf16.mxu0 0
    %281 = vmatpush1.bf16.msra.mxu0 0
    %282 = vmatprep.subr.bf16.mxu0 0
    %283 = vmatpush1.bf16.msra.mxu0 0
    %284 = vmatprep.subr.bf16.mxu0 0
    %285 = vmatpush1.bf16.msra.mxu0 0
    %286 = vmatprep.subr.bf16.mxu0 0
    %287 = vmatpush1.bf16.msra.mxu0 0
    %288 = vmatprep.subr.bf16.mxu0 0
    %289 = vmatpush1.bf16.msra.mxu0 0
    %290 = vmatprep.mubr.bf16.mxu0 0
    %291 = vmatmul.mubr.bf16.gmra.mrb[0].mxu0 %v189
    %v292 = vpop.f32.mrb[0].mxu0
    %v293 = vadd.f32 %v209, %v292
    %v294 = vpop.f32.mrb[0].mxu0
    %v295 = vpop.f32.mrb[0].mxu0
    %v296 = vpop.f32.mrb[0].mxu0
    %297 = vdwg.mxu0
    %v298 = vmax.f32 %v293, 0.0
    %v299 = vpack.c.bf16 %v298, %v298
    %v300 = vld [vmem:[#allocation8] sm:$0xf]
    %v301 = vld [vmem:[#allocation8 + $0x4] sm:$0xf]
    %v302 = vld [vmem:[#allocation8 + $0x8] sm:$0xf]
    %v303 = vld [vmem:[#allocation8 + $0xc] sm:$0xf]
    %v304 = vld [vmem:[#allocation8 + $0x10] sm:$0xf]
    %v305 = vld [vmem:[#allocation8 + $0x14] sm:$0xf]
    %v306 = vld [vmem:[#allocation8 + $0x18] sm:$0xf]
    %v307 = vld [vmem:[#allocation8 + $0x1c] sm:$0xf]
    %v308 = vld [vmem:[#allocation8 + $0x20] sm:$0xf]
    %v309 = vld [vmem:[#allocation8 + $0x24] sm:$0xf]
    %v310 = vld [vmem:[#allocation8 + $0x28] sm:$0xf]
    %v311 = vld [vmem:[#allocation8 + $0x2c] sm:$0xf]
    %v312 = vld [vmem:[#allocation8 + $0x30] sm:$0xf]
    %v313 = vld [vmem:[#allocation8 + $0x34] sm:$0xf]
    %v314 = vld [vmem:[#allocation8 + $0x38] sm:$0xf]
    %v315 = vld [vmem:[#allocation8 + $0x3c] sm:$0xf]
    %v316 = vlaneseq
    %v317 = vshrl.u32 %v316, 7
    %v318 = vsub.s32 0, %v317
    %v319 = vrot.slane %v77, %v318
    %v336 = vunpack.c.l.b16 %v300
    %v337 = vunpack.c.l.b16 %v301
    %v338 = vunpack.c.l.b16 %v302
    %v339 = vunpack.c.l.b16 %v303
    %v340 = vunpack.c.l.b16 %v304
    %v341 = vunpack.c.l.b16 %v305
    %v342 = vunpack.c.l.b16 %v306
    %v343 = vunpack.c.l.b16 %v307
    %v344 = vunpack.c.l.b16 %v308
    %v345 = vunpack.c.l.b16 %v309
    %v346 = vunpack.c.l.b16 %v310
    %v347 = vunpack.c.l.b16 %v311
    %v348 = vunpack.c.l.b16 %v312
    %v349 = vunpack.c.l.b16 %v313
    %v350 = vunpack.c.l.b16 %v314
    %v351 = vunpack.c.l.b16 %v315
    %v352 = vpack.c.b16 %v337, %v336
    %v353 = vpack.c.b16 %v339, %v338
    %v354 = vpack.c.b16 %v341, %v340
    %v355 = vpack.c.b16 %v343, %v342
    %v356 = vpack.c.b16 %v345, %v344
    %v357 = vpack.c.b16 %v347, %v346
    %v358 = vpack.c.b16 %v349, %v348
    %v359 = vpack.c.b16 %v351, %v350
    %368 = vmatprep.subr.bf16.mxu0 0
    %369 = vmatpush1.bf16.msra.mxu0 %v352
    %370 = vmatprep.subr.bf16.mxu0 0
    %371 = vmatpush1.bf16.msra.mxu0 %v353
    %372 = vmatprep.subr.bf16.mxu0 0
    %373 = vmatpush1.bf16.msra.mxu0 %v354
    %374 = vmatprep.subr.bf16.mxu0 0
    %375 = vmatpush1.bf16.msra.mxu0 %v355
    %376 = vmatprep.subr.bf16.mxu0 0
    %377 = vmatpush1.bf16.msra.mxu0 %v356
    %378 = vmatprep.subr.bf16.mxu0 0
    %379 = vmatpush1.bf16.msra.mxu0 %v357
    %380 = vmatprep.subr.bf16.mxu0 0
    %381 = vmatpush1.bf16.msra.mxu0 %v358
    %382 = vmatprep.subr.bf16.mxu0 0
    %383 = vmatpush1.bf16.msra.mxu0 %v359
    %384 = vmatprep.subr.bf16.mxu0 0
    %385 = vmatpush1.bf16.msra.mxu0 0
    %386 = vmatprep.subr.bf16.mxu0 0
    %387 = vmatpush1.bf16.msra.mxu0 0
    %388 = vmatprep.subr.bf16.mxu0 0
    %389 = vmatpush1.bf16.msra.mxu0 0
    %390 = vmatprep.subr.bf16.mxu0 0
    %391 = vmatpush1.bf16.msra.mxu0 0
    %392 = vmatprep.subr.bf16.mxu0 0
    %393 = vmatpush1.bf16.msra.mxu0 0
    %394 = vmatprep.subr.bf16.mxu0 0
    %395 = vmatpush1.bf16.msra.mxu0 0
    %396 = vmatprep.subr.bf16.mxu0 0
    %397 = vmatpush1.bf16.msra.mxu0 0
    %398 = vmatprep.subr.bf16.mxu0 0
    %399 = vmatpush1.bf16.msra.mxu0 0
    %400 = vmatprep.mubr.bf16.mxu0 0
    %401 = vmatmul.mubr.bf16.gmra.mrb[0].mxu0 %v299
    %v402 = vpop.f32.mrb[0].mxu0
    %v403 = vadd.f32 %v319, %v402
    %v404 = vpop.f32.mrb[0].mxu0
    %v405 = vpop.f32.mrb[0].mxu0
    %v406 = vpop.f32.mrb[0].mxu0
    %407 = vdwg.mxu0
    %408 = vst [vmem:[#allocation10] sm:$0xff] %v403
    // Predicated region
    $region38: #{tpu_custom_call.1} parent=1 // pred_check
      _
    $region39: #{tpu_custom_call.1} parent=1 // pred_check_branch
      %410 = sbr.rel (0) target = $region41
    $region40: #{tpu_custom_call.1} parent=1 // pred_region
      %s412 = ssub.s32 128, 128
      %413 = vsyncadd [#allocation4], %s412
      %s415 = sshll.u32 [#allocation10], 4
      %s416 = int_to_ptr.vmem [resolvable:$true] %s415
      %418 = dma.vmem_to_hbm [thread:$0]  %s416, 128, %s5, [#allocation4]
    $region41: #{tpu_custom_call.1} parent=1 // pred_fallthru
      _
    // Predicated region
    $region42: #{tpu_custom_call.1} parent=1 // pred_check
      _
    $region43: #{tpu_custom_call.1} parent=1 // pred_check_branch
      %420 = sbr.rel (0) target = $region45
    $region44: #{tpu_custom_call.1} parent=1 // pred_region
      %421 = dma.done [#allocation4], 128
    $region45: #{tpu_custom_call.1} parent=1 // pred_fallthru
      _
    %422 = vsyncpa [#allocation3], 1
    %423 = vsyncpa [#allocation6], 1
    %424 = vsyncpa [#allocation9], 1
    %425 = vsyncpa [#allocation4], 1

// kernel: tpu_custom_call.1
$region0: #{tpu_custom_call.1}
  #allocation0 [shape = 'u32[]', space=smem, size = 0x4, offset = 0x4, fixed_abs, tag = 'smem constant byte address 0x4 - core index']
  #allocation1 [shape = 'u32[144,128]{1,0:T(1,128)}', space=vmem, size = 0x12000, scoped, tag = 'internal scratch']
  %s0 = inlined_call_operand.hbm [shape: f32[8,128], index: 0, kind: input, shape index: {}]
  %s1 = inlined_call_operand.hbm [shape: bf16[128,128], index: 1, kind: input, shape index: {}]
  %s2 = inlined_call_operand.hbm [shape: bf16[128,128], index: 2, kind: input, shape index: {}]
  %s3 = inlined_call_operand.hbm [shape: bf16[128,128], index: 3, kind: input, shape index: {}]
  %s4 = inlined_call_operand.vmem [shape: f32[3,128], index: 4, kind: input, shape index: {}]
  %s5 = inlined_call_operand.hbm [shape: f32[8,128], index: 5, kind: output, shape index: {}]
  %s6 = sld [smem:[#allocation0]]
  $region46: #{tpu_custom_call.1} parent=0
    _
  %s8 = ssub.s32 1, %s6
  %s9 = scalar_select 0, %s8, %s6
  $region1: #{tpu_custom_call.1} parent=0
    #allocation2 [shape = 'u8[4096]{0}', space=vmem, size = 0x1000, scoped, tag = 'input window, operand 0, single buffered']
    #allocation3 [shape = 's32[1]{0}', space=sflag, size = 0x4, scoped, tag = 'scoped memory for tpu_custom_call.1']
    #allocation4 [shape = 's32[1]{0}', space=sflag, size = 0x4, scoped, tag = 'scoped memory for tpu_custom_call.1']
    #allocation5 [shape = 'u8[32768]{0}', space=vmem, size = 0x8000, scoped, tag = 'input window, operand 1, single buffered']
    #allocation6 [shape = 's32[1]{0}', space=sflag, size = 0x4, scoped, tag = 'scoped memory for tpu_custom_call.1']
    #allocation7 [shape = 'u8[32768]{0}', space=vmem, size = 0x8000, scoped, tag = 'input window, operand 2, single buffered']
    #allocation8 [shape = 'u8[32768]{0}', space=vmem, size = 0x8000, scoped, tag = 'input window, operand 3, single buffered']
    #allocation9 [shape = 's32[1]{0}', space=sflag, size = 0x4, scoped, tag = 'scoped memory for tpu_custom_call.1']
    #allocation10 [shape = 'u8[4096]{0}', space=vmem, size = 0x1000, scoped, tag = 'output window, operand 0, single buffered']
    %10 = vsyncpa [#allocation3], 0
    %11 = vsyncpa [#allocation6], 0
    %12 = vsyncpa [#allocation9], 0
    %13 = vsyncpa [#allocation4], 0
    // Predicated region
    $region2: #{tpu_custom_call.1} parent=1 // pred_check
      _
    $region3: #{tpu_custom_call.1} parent=1 // pred_check_branch
      %15 = sbr.rel (0) target = $region5
    $region4: #{tpu_custom_call.1} parent=1 // pred_region
      %s17 = ssub.s32 128, 128
      %18 = vsyncadd [#allocation3], %s17
      %s20 = sshll.u32 [#allocation2], 4
      %s21 = int_to_ptr.vmem [resolvable:$true] %s20
      %23 = dma.hbm_to_vmem [thread:$0]  %s0, 128, %s21, [#allocation3]
    $region5: #{tpu_custom_call.1} parent=1 // pred_fallthru
      _
    // Predicated region
    $region6: #{tpu_custom_call.1} parent=1 // pred_check
      _
    $region7: #{tpu_custom_call.1} parent=1 // pred_check_branch
      %25 = sbr.rel (0) target = $region9
    $region8: #{tpu_custom_call.1} parent=1 // pred_region
      %s27 = ssub.s32 1024, 1024
      %28 = vsyncadd [#allocation6], %s27
      %s29 = sshll.u32 [#allocation5], 4
      %s30 = int_to_ptr.vmem [resolvable:$true] %s29
      %35 = dma.hbm_to_vmem [thread:$0]  %s1, 1024, %s30, [#allocation6], 64, 64, 4
    $region9: #{tpu_custom_call.1} parent=1 // pred_fallthru
      _
    // Predicated region
    $region10: #{tpu_custom_call.1} parent=1 // pred_check
      _
    $region11: #{tpu_custom_call.1} parent=1 // pred_check_branch
      %37 = sbr.rel (0) target = $region13
    $region12: #{tpu_custom_call.1} parent=1 // pred_region
      %s39 = ssub.s32 1024, 1024
      %40 = vsyncadd [#allocation6], %s39
      %s41 = sshll.u32 [#allocation7], 4
      %s42 = int_to_ptr.vmem [resolvable:$true] %s41
      %47 = dma.hbm_to_vmem [thread:$0]  %s2, 1024, %s42, [#allocation6], 64, 64, 4
    $region13: #{tpu_custom_call.1} parent=1 // pred_fallthru
      _
    // Predicated region
    $region14: #{tpu_custom_call.1} parent=1 // pred_check
      _
    $region15: #{tpu_custom_call.1} parent=1 // pred_check_branch
      %49 = sbr.rel (0) target = $region17
    $region16: #{tpu_custom_call.1} parent=1 // pred_region
      %s51 = ssub.s32 1024, 1024
      %52 = vsyncadd [#allocation9], %s51
      %s53 = sshll.u32 [#allocation8], 4
      %s54 = int_to_ptr.vmem [resolvable:$true] %s53
      %59 = dma.hbm_to_vmem [thread:$0]  %s3, 1024, %s54, [#allocation9], 64, 64, 4
    $region17: #{tpu_custom_call.1} parent=1 // pred_fallthru
      _
    // Predicated region
    $region18: #{tpu_custom_call.1} parent=1 // pred_check
      _
    $region19: #{tpu_custom_call.1} parent=1 // pred_check_branch
      %61 = sbr.rel (0) target = $region21
    $region20: #{tpu_custom_call.1} parent=1 // pred_region
      _
    $region21: #{tpu_custom_call.1} parent=1 // pred_fallthru
      _
    // Predicated region
    $region22: #{tpu_custom_call.1} parent=1 // pred_check
      _
    $region23: #{tpu_custom_call.1} parent=1 // pred_check_branch
      %63 = sbr.rel (0) target = $region25
    $region24: #{tpu_custom_call.1} parent=1 // pred_region
      %64 = dma.done [#allocation3], 128
    $region25: #{tpu_custom_call.1} parent=1 // pred_fallthru
      _
    // Predicated region
    $region26: #{tpu_custom_call.1} parent=1 // pred_check
      _
    $region27: #{tpu_custom_call.1} parent=1 // pred_check_branch
      %66 = sbr.rel (0) target = $region29
    $region28: #{tpu_custom_call.1} parent=1 // pred_region
      %67 = dma.done [#allocation6], 1024
    $region29: #{tpu_custom_call.1} parent=1 // pred_fallthru
      _
    // Predicated region
    $region30: #{tpu_custom_call.1} parent=1 // pred_check
      _
    $region31: #{tpu_custom_call.1} parent=1 // pred_check_branch
      %69 = sbr.rel (0) target = $region33
    $region32: #{tpu_custom_call.1} parent=1 // pred_region
      %70 = dma.done [#allocation6], 1024
    $region33: #{tpu_custom_call.1} parent=1 // pred_fallthru
      _
    // Predicated region
    $region34: #{tpu_custom_call.1} parent=1 // pred_check
      _
    $region35: #{tpu_custom_call.1} parent=1 // pred_check_branch
      %72 = sbr.rel (0) target = $region37
    $region36: #{tpu_custom_call.1} parent=1 // pred_region
      %73 = dma.done [#allocation9], 1024
    $region37: #{tpu_custom_call.1} parent=1 // pred_fallthru
      _
    %v75 = vld [vmem:[%s4] sm:$0x1]
    %v76 = vld [vmem:[%s4 + $0x1] sm:$0x1]
    %v77 = vld [vmem:[%s4 + $0x2] sm:$0x1]
    %v78 = vld [vmem:[#allocation2] sm:$0xff]
    %v79 = vpack.c.bf16 %v78, %v78
    %v80 = vld [vmem:[#allocation5] sm:$0xf]
    %v81 = vld [vmem:[#allocation5 + $0x4] sm:$0xf]
    %v82 = vld [vmem:[#allocation5 + $0x8] sm:$0xf]
    %v83 = vld [vmem:[#allocation5 + $0xc] sm:$0xf]
    %v84 = vld [vmem:[#allocation5 + $0x10] sm:$0xf]
    %v85 = vld [vmem:[#allocation5 + $0x14] sm:$0xf]
    %v86 = vld [vmem:[#allocation5 + $0x18] sm:$0xf]
    %v87 = vld [vmem:[#allocation5 + $0x1c] sm:$0xf]
    %v88 = vld [vmem:[#allocation5 + $0x20] sm:$0xf]
    %v89 = vld [vmem:[#allocation5 + $0x24] sm:$0xf]
    %v90 = vld [vmem:[#allocation5 + $0x28] sm:$0xf]
    %v91 = vld [vmem:[#allocation5 + $0x2c] sm:$0xf]
    %v92 = vld [vmem:[#allocation5 + $0x30] sm:$0xf]
    %v93 = vld [vmem:[#allocation5 + $0x34] sm:$0xf]
    %v94 = vld [vmem:[#allocation5 + $0x38] sm:$0xf]
    %v95 = vld [vmem:[#allocation5 + $0x3c] sm:$0xf]
    %v96 = vlaneseq
    %v97 = vshrl.u32 %v96, 7
    %v98 = vsub.s32 0, %v97
    %v99 = vrot.slane %v75, %v98
    %v116 = vunpack.c.l.b16 %v80
    %v117 = vunpack.c.l.b16 %v81
    %v118 = vunpack.c.l.b16 %v82
    %v119 = vunpack.c.l.b16 %v83
    %v120 = vunpack.c.l.b16 %v84
    %v121 = vunpack.c.l.b16 %v85
    %v122 = vunpack.c.l.b16 %v86
    %v123 = vunpack.c.l.b16 %v87
    %v124 = vunpack.c.l.b16 %v88
    %v125 = vunpack.c.l.b16 %v89
    %v126 = vunpack.c.l.b16 %v90
    %v127 = vunpack.c.l.b16 %v91
    %v128 = vunpack.c.l.b16 %v92
    %v129 = vunpack.c.l.b16 %v93
    %v130 = vunpack.c.l.b16 %v94
    %v131 = vunpack.c.l.b16 %v95
    %v132 = vpack.c.b16 %v117, %v116
    %v133 = vpack.c.b16 %v119, %v118
    %v134 = vpack.c.b16 %v121, %v120
    %v135 = vpack.c.b16 %v123, %v122
    %v136 = vpack.c.b16 %v125, %v124
    %v137 = vpack.c.b16 %v127, %v126
    %v138 = vpack.c.b16 %v129, %v128
    %v139 = vpack.c.b16 %v131, %v130
    %148 = vmatprep.subr.bf16.mxu0 0
    %149 = vmatpush1.bf16.msra.mxu0 %v132
    %150 = vmatprep.subr.bf16.mxu0 0
    %151 = vmatpush1.bf16.msra.mxu0 %v133
    %152 = vmatprep.subr.bf16.mxu0 0
    %153 = vmatpush1.bf16.msra.mxu0 %v134
    %154 = vmatprep.subr.bf16.mxu0 0
    %155 = vmatpush1.bf16.msra.mxu0 %v135
    %156 = vmatprep.subr.bf16.mxu0 0
    %157 = vmatpush1.bf16.msra.mxu0 %v136
    %158 = vmatprep.subr.bf16.mxu0 0
    %159 = vmatpush1.bf16.msra.mxu0 %v137
    %160 = vmatprep.subr.bf16.mxu0 0
    %161 = vmatpush1.bf16.msra.mxu0 %v138
    %162 = vmatprep.subr.bf16.mxu0 0
    %163 = vmatpush1.bf16.msra.mxu0 %v139
    %164 = vmatprep.subr.bf16.mxu0 0
    %165 = vmatpush1.bf16.msra.mxu0 0
    %166 = vmatprep.subr.bf16.mxu0 0
    %167 = vmatpush1.bf16.msra.mxu0 0
    %168 = vmatprep.subr.bf16.mxu0 0
    %169 = vmatpush1.bf16.msra.mxu0 0
    %170 = vmatprep.subr.bf16.mxu0 0
    %171 = vmatpush1.bf16.msra.mxu0 0
    %172 = vmatprep.subr.bf16.mxu0 0
    %173 = vmatpush1.bf16.msra.mxu0 0
    %174 = vmatprep.subr.bf16.mxu0 0
    %175 = vmatpush1.bf16.msra.mxu0 0
    %176 = vmatprep.subr.bf16.mxu0 0
    %177 = vmatpush1.bf16.msra.mxu0 0
    %178 = vmatprep.subr.bf16.mxu0 0
    %179 = vmatpush1.bf16.msra.mxu0 0
    %180 = vmatprep.mubr.bf16.mxu0 0
    %181 = vmatmul.mubr.bf16.gmra.mrb[0].mxu0 %v79
    %v182 = vpop.f32.mrb[0].mxu0
    %v183 = vadd.f32 %v99, %v182
    %v184 = vpop.f32.mrb[0].mxu0
    %v185 = vpop.f32.mrb[0].mxu0
    %v186 = vpop.f32.mrb[0].mxu0
    %187 = vdwg.mxu0
    %v188 = vmax.f32 %v183, 0.0
    %v189 = vpack.c.bf16 %v188, %v188
    %v190 = vld [vmem:[#allocation7] sm:$0xf]
    %v191 = vld [vmem:[#allocation7 + $0x4] sm:$0xf]
    %v192 = vld [vmem:[#allocation7 + $0x8] sm:$0xf]
    %v193 = vld [vmem:[#allocation7 + $0xc] sm:$0xf]
    %v194 = vld [vmem:[#allocation7 + $0x10] sm:$0xf]
    %v195 = vld [vmem:[#allocation7 + $0x14] sm:$0xf]
    %v196 = vld [vmem:[#allocation7 + $0x18] sm:$0xf]
    %v197 = vld [vmem:[#allocation7 + $0x1c] sm:$0xf]
    %v198 = vld [vmem:[#allocation7 + $0x20] sm:$0xf]
    %v199 = vld [vmem:[#allocation7 + $0x24] sm:$0xf]
    %v200 = vld [vmem:[#allocation7 + $0x28] sm:$0xf]
    %v201 = vld [vmem:[#allocation7 + $0x2c] sm:$0xf]
    %v202 = vld [vmem:[#allocation7 + $0x30] sm:$0xf]
    %v203 = vld [vmem:[#allocation7 + $0x34] sm:$0xf]
    %v204 = vld [vmem:[#allocation7 + $0x38] sm:$0xf]
    %v205 = vld [vmem:[#allocation7 + $0x3c] sm:$0xf]
    %v206 = vlaneseq
    %v207 = vshrl.u32 %v206, 7
    %v208 = vsub.s32 0, %v207
    %v209 = vrot.slane %v76, %v208
    %v226 = vunpack.c.l.b16 %v190
    %v227 = vunpack.c.l.b16 %v191
    %v228 = vunpack.c.l.b16 %v192
    %v229 = vunpack.c.l.b16 %v193
    %v230 = vunpack.c.l.b16 %v194
    %v231 = vunpack.c.l.b16 %v195
    %v232 = vunpack.c.l.b16 %v196
    %v233 = vunpack.c.l.b16 %v197
    %v234 = vunpack.c.l.b16 %v198
    %v235 = vunpack.c.l.b16 %v199
    %v236 = vunpack.c.l.b16 %v200
    %v237 = vunpack.c.l.b16 %v201
    %v238 = vunpack.c.l.b16 %v202
    %v239 = vunpack.c.l.b16 %v203
    %v240 = vunpack.c.l.b16 %v204
    %v241 = vunpack.c.l.b16 %v205
    %v242 = vpack.c.b16 %v227, %v226
    %v243 = vpack.c.b16 %v229, %v228
    %v244 = vpack.c.b16 %v231, %v230
    %v245 = vpack.c.b16 %v233, %v232
    %v246 = vpack.c.b16 %v235, %v234
    %v247 = vpack.c.b16 %v237, %v236
    %v248 = vpack.c.b16 %v239, %v238
    %v249 = vpack.c.b16 %v241, %v240
    %258 = vmatprep.subr.bf16.mxu0 0
    %259 = vmatpush1.bf16.msra.mxu0 %v242
    %260 = vmatprep.subr.bf16.mxu0 0
    %261 = vmatpush1.bf16.msra.mxu0 %v243
    %262 = vmatprep.subr.bf16.mxu0 0
    %263 = vmatpush1.bf16.msra.mxu0 %v244
    %264 = vmatprep.subr.bf16.mxu0 0
    %265 = vmatpush1.bf16.msra.mxu0 %v245
    %266 = vmatprep.subr.bf16.mxu0 0
    %267 = vmatpush1.bf16.msra.mxu0 %v246
    %268 = vmatprep.subr.bf16.mxu0 0
    %269 = vmatpush1.bf16.msra.mxu0 %v247
    %270 = vmatprep.subr.bf16.mxu0 0
    %271 = vmatpush1.bf16.msra.mxu0 %v248
    %272 = vmatprep.subr.bf16.mxu0 0
    %273 = vmatpush1.bf16.msra.mxu0 %v249
    %274 = vmatprep.subr.bf16.mxu0 0
    %275 = vmatpush1.bf16.msra.mxu0 0
    %276 = vmatprep.subr.bf16.mxu0 0
    %277 = vmatpush1.bf16.msra.mxu0 0
    %278 = vmatprep.subr.bf16.mxu0 0
    %279 = vmatpush1.bf16.msra.mxu0 0
    %280 = vmatprep.subr.bf16.mxu0 0
    %281 = vmatpush1.bf16.msra.mxu0 0
    %282 = vmatprep.subr.bf16.mxu0 0
    %283 = vmatpush1.bf16.msra.mxu0 0
    %284 = vmatprep.subr.bf16.mxu0 0
    %285 = vmatpush1.bf16.msra.mxu0 0
    %286 = vmatprep.subr.bf16.mxu0 0
    %287 = vmatpush1.bf16.msra.mxu0 0
    %288 = vmatprep.subr.bf16.mxu0 0
    %289 = vmatpush1.bf16.msra.mxu0 0
    %290 = vmatprep.mubr.bf16.mxu0 0
    %291 = vmatmul.mubr.bf16.gmra.mrb[0].mxu0 %v189
    %v292 = vpop.f32.mrb[0].mxu0
    %v293 = vadd.f32 %v209, %v292
    %v294 = vpop.f32.mrb[0].mxu0
    %v295 = vpop.f32.mrb[0].mxu0
    %v296 = vpop.f32.mrb[0].mxu0
    %297 = vdwg.mxu0
    %v298 = vmax.f32 %v293, 0.0
    %v299 = vpack.c.bf16 %v298, %v298
    %v300 = vld [vmem:[#allocation8] sm:$0xf]
    %v301 = vld [vmem:[#allocation8 + $0x4] sm:$0xf]
    %v302 = vld [vmem:[#allocation8 + $0x8] sm:$0xf]
    %v303 = vld [vmem:[#allocation8 + $0xc] sm:$0xf]
    %v304 = vld [vmem:[#allocation8 + $0x10] sm:$0xf]
    %v305 = vld [vmem:[#allocation8 + $0x14] sm:$0xf]
    %v306 = vld [vmem:[#allocation8 + $0x18] sm:$0xf]
    %v307 = vld [vmem:[#allocation8 + $0x1c] sm:$0xf]
    %v308 = vld [vmem:[#allocation8 + $0x20] sm:$0xf]
    %v309 = vld [vmem:[#allocation8 + $0x24] sm:$0xf]
    %v310 = vld [vmem:[#allocation8 + $0x28] sm:$0xf]
    %v311 = vld [vmem:[#allocation8 + $0x2c] sm:$0xf]
    %v312 = vld [vmem:[#allocation8 + $0x30] sm:$0xf]
    %v313 = vld [vmem:[#allocation8 + $0x34] sm:$0xf]
    %v314 = vld [vmem:[#allocation8 + $0x38] sm:$0xf]
    %v315 = vld [vmem:[#allocation8 + $0x3c] sm:$0xf]
    %v316 = vlaneseq
    %v317 = vshrl.u32 %v316, 7
    %v318 = vsub.s32 0, %v317
    %v319 = vrot.slane %v77, %v318
    %v336 = vunpack.c.l.b16 %v300
    %v337 = vunpack.c.l.b16 %v301
    %v338 = vunpack.c.l.b16 %v302
    %v339 = vunpack.c.l.b16 %v303
    %v340 = vunpack.c.l.b16 %v304
    %v341 = vunpack.c.l.b16 %v305
    %v342 = vunpack.c.l.b16 %v306
    %v343 = vunpack.c.l.b16 %v307
    %v344 = vunpack.c.l.b16 %v308
    %v345 = vunpack.c.l.b16 %v309
    %v346 = vunpack.c.l.b16 %v310
    %v347 = vunpack.c.l.b16 %v311
    %v348 = vunpack.c.l.b16 %v312
    %v349 = vunpack.c.l.b16 %v313
    %v350 = vunpack.c.l.b16 %v314
    %v351 = vunpack.c.l.b16 %v315
    %v352 = vpack.c.b16 %v337, %v336
    %v353 = vpack.c.b16 %v339, %v338
    %v354 = vpack.c.b16 %v341, %v340
    %v355 = vpack.c.b16 %v343, %v342
    %v356 = vpack.c.b16 %v345, %v344
    %v357 = vpack.c.b16 %v347, %v346
    %v358 = vpack.c.b16 %v349, %v348
    %v359 = vpack.c.b16 %v351, %v350
    %368 = vmatprep.subr.bf16.mxu0 0
    %369 = vmatpush1.bf16.msra.mxu0 %v352
    %370 = vmatprep.subr.bf16.mxu0 0
    %371 = vmatpush1.bf16.msra.mxu0 %v353
    %372 = vmatprep.subr.bf16.mxu0 0
    %373 = vmatpush1.bf16.msra.mxu0 %v354
    %374 = vmatprep.subr.bf16.mxu0 0
    %375 = vmatpush1.bf16.msra.mxu0 %v355
    %376 = vmatprep.subr.bf16.mxu0 0
    %377 = vmatpush1.bf16.msra.mxu0 %v356
    %378 = vmatprep.subr.bf16.mxu0 0
    %379 = vmatpush1.bf16.msra.mxu0 %v357
    %380 = vmatprep.subr.bf16.mxu0 0
    %381 = vmatpush1.bf16.msra.mxu0 %v358
    %382 = vmatprep.subr.bf16.mxu0 0
    %383 = vmatpush1.bf16.msra.mxu0 %v359
    %384 = vmatprep.subr.bf16.mxu0 0
    %385 = vmatpush1.bf16.msra.mxu0 0
    %386 = vmatprep.subr.bf16.mxu0 0
    %387 = vmatpush1.bf16.msra.mxu0 0
    %388 = vmatprep.subr.bf16.mxu0 0
    %389 = vmatpush1.bf16.msra.mxu0 0
    %390 = vmatprep.subr.bf16.mxu0 0
    %391 = vmatpush1.bf16.msra.mxu0 0
    %392 = vmatprep.subr.bf16.mxu0 0
    %393 = vmatpush1.bf16.msra.mxu0 0
    %394 = vmatprep.subr.bf16.mxu0 0
    %395 = vmatpush1.bf16.msra.mxu0 0
    %396 = vmatprep.subr.bf16.mxu0 0
    %397 = vmatpush1.bf16.msra.mxu0 0
    %398 = vmatprep.subr.bf16.mxu0 0
    %399 = vmatpush1.bf16.msra.mxu0 0
    %400 = vmatprep.mubr.bf16.mxu0 0
    %401 = vmatmul.mubr.bf16.gmra.mrb[0].mxu0 %v299
    %v402 = vpop.f32.mrb[0].mxu0
    %v403 = vadd.f32 %v319, %v402
    %v404 = vpop.f32.mrb[0].mxu0
    %v405 = vpop.f32.mrb[0].mxu0
    %v406 = vpop.f32.mrb[0].mxu0
    %407 = vdwg.mxu0
    %408 = vst [vmem:[#allocation10] sm:$0xff] %v403
    // Predicated region
    $region38: #{tpu_custom_call.1} parent=1 // pred_check
      _
    $region39: #{tpu_custom_call.1} parent=1 // pred_check_branch
      %410 = sbr.rel (0) target = $region41
    $region40: #{tpu_custom_call.1} parent=1 // pred_region
      %s412 = ssub.s32 128, 128
      %413 = vsyncadd [#allocation4], %s412
      %s415 = sshll.u32 [#allocation10], 4
      %s416 = int_to_ptr.vmem [resolvable:$true] %s415
      %418 = dma.vmem_to_hbm [thread:$0]  %s416, 128, %s5, [#allocation4]
    $region41: #{tpu_custom_call.1} parent=1 // pred_fallthru
      _
    // Predicated region
    $region42: #{tpu_custom_call.1} parent=1 // pred_check
      _
    $region43: #{tpu_custom_call.1} parent=1 // pred_check_branch
      %420 = sbr.rel (0) target = $region45
    $region44: #{tpu_custom_call.1} parent=1 // pred_region
      %421 = dma.done [#allocation4], 128
    $region45: #{tpu_custom_call.1} parent=1 // pred_fallthru
      _
    %422 = vsyncpa [#allocation3], 1
    %423 = vsyncpa [#allocation6], 1
    %424 = vsyncpa [#allocation9], 1
    %425 = vsyncpa [#allocation4], 1

</llo_original>
